<compile_context>
chip_gen: v5e
topology: v5e:2x2
jax: 0.10.0
libtpu: 0.0.40
codegen_flags: <defaults>
</compile_context>

<pallas_src>
import numpy as np
import jax
import jax.numpy as jnp
from jax import lax
from jax.experimental import pallas as pl
from jax.experimental.pallas import tpu as pltpu


def _moe_kernel(x_ref, task_ref, w1_ref, b1_ref, w2kv_ref, bkv_ref, tq_ref,
                ssel_ref, esel_ref, gsel_ref, tower_ref):
    """One batch-tile of the fused MoE forward.

    x_ref    : (bt, In)          backbone output tile (compute_dtype)
    task_ref : (bt, 1) int32     task ids
    w1_ref   : (In, E*H1)        all experts' first Linear, lane-packed
    b1_ref   : (1, E*H1)         f32
    w2kv_ref : (E*H1, 2*E*D)     block-diag fused [W2@KM | W2@VM]
    bkv_ref  : (1, 2*E*D)        fused biases [b2@KM | b2@VM], f32
    tq_ref   : (num_tasks, E*D)  resident task-query table, tiled E times
    ssel_ref : (E*D, E)          0/1 selector: per-expert lane sum
    esel_ref : (E, E*D)          0/1 selector: broadcast attn over D lanes
    gsel_ref : (E*D, D)          0/1 selector: sum over experts per feature
    tower_ref: (bt, D)           tower_input output (f32)
    """
    wdt = w1_ref.dtype                       # bf16 fast path or f32
    x = x_ref[...]                           # already cast in the wrapper

    # Stage 1: all experts' Linear + ReLU in one lane-packed matmul.
    h = jnp.dot(x, w1_ref[...], preferred_element_type=jnp.float32) + b1_ref[...]
    h = jnp.maximum(h, 0.0)

    # Stage 2: fused (Linear2 @ KM | Linear2 @ VM), block-diagonal over experts.
    kv = jnp.dot(h.astype(wdt), w2kv_ref[...],
                 preferred_element_type=jnp.float32) + bkv_ref[...]

    ed = tq_ref.shape[-1]                    # E * D (= 128 here)
    keys = kv[:, :ed]                        # (bt, E*D)  [k_0 | k_1 | ...]
    vals = kv[:, ed:]                        # (bt, E*D)  [v_0 | v_1 | ...]

    # Rebuild the per-row task query tile from the (bt,1) int32 ids and the
    # resident pre-tiled table: one-hot (iota == id) @ table, K = num_tasks.
    bt = x.shape[0]
    nt = tq_ref.shape[0]
    onehot = (lax.broadcasted_iota(jnp.int32, (bt, nt), 1)
              == task_ref[...]).astype(wdt)                   # (bt, NT)
    tqt = jnp.dot(onehot, tq_ref[...],
                  preferred_element_type=jnp.float32)          # (bt, E*D)

    # attention scores: s[b, e] = <k_e[b], tq[b]>  (lane-dense, no concat)
    s = jnp.dot((keys * tqt).astype(wdt), ssel_ref[...],
                preferred_element_type=jnp.float32)            # (bt, E)
    m = jnp.max(s, axis=-1, keepdims=True)
    p = jnp.exp(s - m)
    attn = p * pl.reciprocal(jnp.sum(p, axis=-1, keepdims=True), approx=True)

    # tower[b, d] = sum_e attn[b, e] * v_e[b, d]   (selector matmuls, no slices)
    w = jnp.dot(attn.astype(wdt), esel_ref[...],
                preferred_element_type=jnp.float32)            # (bt, E*D)
    tower_ref[...] = jnp.dot((w * vals).astype(wdt), gsel_ref[...],
                             preferred_element_type=jnp.float32)


def _pack_params(params, compute_dtype):
    """Build lane-packed / algebraically-fused operands for the kernel."""
    w1, b1, w2, b2, km, vm, task_queries = params
    E, In, H1 = w1.shape
    D = w2.shape[-1]

    # Stage 1: (In, E*H1)
    w1p = jnp.transpose(w1, (1, 0, 2)).reshape(In, E * H1)
    b1p = b1.reshape(1, E * H1)

    # Stage 2 fusion: W2K_e = W2_e @ KM_e, W2V_e = W2_e @ VM_e (+ fused biases).
    w2k = jnp.einsum('ehd,edf->ehf', w2, km)          # (E, H1, D)
    w2v = jnp.einsum('ehd,edf->ehf', w2, vm)
    bk = jnp.einsum('ed,edf->ef', b2, km)             # (E, D)
    bv = jnp.einsum('ed,edf->ef', b2, vm)
    w2k_bd = jax.scipy.linalg.block_diag(*[w2k[e] for e in range(E)])  # (E*H1, E*D)
    w2v_bd = jax.scipy.linalg.block_diag(*[w2v[e] for e in range(E)])
    w2kv = jnp.concatenate([w2k_bd, w2v_bd], axis=1)                   # (E*H1, 2*E*D)
    bkv = jnp.concatenate([bk.reshape(1, -1), bv.reshape(1, -1)], axis=1)

    # Resident task-query table, tiled E times along lanes: (num_tasks, E*D).
    tq_tiled = jnp.tile(task_queries, (1, E))

    # 0/1 selector matrices (kept in compute_dtype: exact in bf16, and bf16
    # operands avoid multi-pass f32 matmuls on the score/combine tail).
    eye_e = jnp.eye(E, dtype=jnp.float32)
    eye_d = jnp.eye(D, dtype=jnp.float32)
    ssel = jnp.repeat(eye_e, D, axis=0)       # (E*D, E)
    esel = jnp.repeat(eye_e, D, axis=1)       # (E, E*D)
    gsel = jnp.tile(eye_d, (E, 1))            # (E*D, D)

    cdt = compute_dtype
    return (w1p.astype(cdt), b1p.astype(jnp.float32), w2kv.astype(cdt),
            bkv.astype(jnp.float32), tq_tiled.astype(cdt),
            ssel.astype(cdt), esel.astype(cdt), gsel.astype(cdt))


def _round_up(n, m):
    return ((n + m - 1) // m) * m


def _pick_batch_tile(batch, target=512):
    """Batch tile: multiple of 8, up to `target`, and guaranteed to give
    >= 2 grid steps whenever the batch splits on sublane (8) boundaries so the
    "parallel" grid axis can shard across both v7x TensorCores."""
    bp8 = _round_up(batch, 8)
    bt = min(target, bp8)
    if bp8 >= 16:
        bt = min(bt, _round_up((batch + 1) // 2, 8))
    return max(bt, 8)


def moe_forward(params, x, task, mu, *, compute_dtype=jnp.float32,
                batch_tile=None):
    """Pallas-backed MoELayer.forward. Returns (tower_input, reg_loss_term)."""
    w1, _b1, w2, _b2, _km, _vm, task_queries = params
    E, In, H1 = w1.shape
    D = w2.shape[-1]
    NT = task_queries.shape[0]
    B = x.shape[0]

    (w1p, b1p, w2kv, bkv, tq_tiled,
     ssel, esel, gsel) = _pack_params(params, compute_dtype)

    bt = batch_tile or _pick_batch_tile(B)
    Bp = _round_up(B, bt)
    nb = Bp // bt

    # Stream activations in compute_dtype (bf16 halves HBM read bytes on all
    # generations); elementwise math inside the kernel stays f32. Pad the batch
    # to a tile multiple instead of requiring exact divisibility.
    xs = x.astype(compute_dtype)
    ts = task.astype(jnp.int32).reshape(B, 1)
    if Bp != B:
        xs = jnp.pad(xs, ((0, Bp - B), (0, 0)))
        ts = jnp.pad(ts, ((0, Bp - B), (0, 0)))

    grid_spec = pltpu.PrefetchScalarGridSpec(
        num_scalar_prefetch=0,
        grid=(nb,),
        in_specs=[
            pl.BlockSpec((bt, In), lambda i: (i, 0)),             # x tile (streamed)
            pl.BlockSpec((bt, 1), lambda i: (i, 0)),              # task ids (streamed)
            pl.BlockSpec((In, E * H1), lambda i: (0, 0)),         # w1p (resident)
            pl.BlockSpec((1, E * H1), lambda i: (0, 0)),          # b1p
            pl.BlockSpec((E * H1, 2 * E * D), lambda i: (0, 0)),  # w2kv (resident)
            pl.BlockSpec((1, 2 * E * D), lambda i: (0, 0)),       # bkv
            pl.BlockSpec((NT, E * D), lambda i: (0, 0)),          # task-query table
            pl.BlockSpec((E * D, E), lambda i: (0, 0)),           # ssel
            pl.BlockSpec((E, E * D), lambda i: (0, 0)),           # esel
            pl.BlockSpec((E * D, D), lambda i: (0, 0)),           # gsel
        ],
        out_specs=pl.BlockSpec((bt, D), lambda i: (i, 0)),        # tower
    )

    tower = pl.pallas_call(
        _moe_kernel,
        out_shape=jax.ShapeDtypeStruct((Bp, D), jnp.float32),
        grid_spec=grid_spec,
        compiler_params=pltpu.CompilerParams(
            dimension_semantics=("parallel",)),
    )(xs, ts, w1p, b1p, w2kv, bkv, tq_tiled, ssel, esel, gsel)

    if Bp != B:
        tower = tower[:B]

    # softmax rows sum to exactly 1, so the reg term is data-independent:
    # reg = -(mu/E) * sum_e (attn_e + 1e-6) = -(mu/E) * (1 + E*1e-6).
    # Computing it analytically removes the narrow (B, E) attn output stream.
    eps = 1.0 / 1000000.0
    reg = jnp.full((B,), -(1.0 / E) * mu * (1.0 + E * eps), dtype=jnp.float32)
    return tower, reg


def moe_reference(params, x, task, mu):
    """Pure-JAX reference matching the PyTorch forward semantics (f32)."""
    w1, b1, w2, b2, km, vm, task_queries = params
    num_experts = w1.shape[0]
    h = jnp.maximum(jnp.einsum('bi,eih->ebh', x, w1) + b1[:, None, :], 0.0)
    o = jnp.einsum('ebh,ehd->ebd', h, w2) + b2[:, None, :]        # (E, B, D)
    expert_outputs = jnp.transpose(o, (1, 0, 2))                  # (B, E, D)
    expert_keys = jnp.einsum('kli,lij->klj', expert_outputs, km)
    expert_values = jnp.einsum('kli,lij->klj', expert_outputs, vm)
    tq = task_queries[task]                                       # (B, D)
    scores = jnp.einsum('kni,ki->kn', expert_keys, tq)
    attn = jax.nn.softmax(scores, axis=-1)
    tower = jnp.einsum('kn,kni->ki', attn, expert_values)
    reg = -(1.0 / num_experts) * mu * jnp.sum(attn + 1e-6, axis=-1)
    return tower, reg


def moe_fused_reference(params, x, task, mu, compute_dtype=jnp.float32):
    """Same fused math as the kernel, in plain jnp (for bf16-path checking)."""
    w1 = params[0]
    E = w1.shape[0]
    D = params[2].shape[-1]
    (w1p, b1p, w2kv, bkv, tq_tiled,
     ssel, esel, gsel) = _pack_params(params, compute_dtype)
    cdt = compute_dtype
    xw = x.astype(cdt)
    h = jnp.maximum(jnp.dot(xw, w1p, preferred_element_type=jnp.float32) + b1p, 0.0)
    kv = jnp.dot(h.astype(cdt), w2kv, preferred_element_type=jnp.float32) + bkv
    ed = E * D
    keys, vals = kv[:, :ed], kv[:, ed:]
    onehot = jax.nn.one_hot(task, tq_tiled.shape[0], dtype=cdt)
    tqt = jnp.dot(onehot, tq_tiled, preferred_element_type=jnp.float32)
    s = jnp.dot((keys * tqt).astype(cdt), ssel, preferred_element_type=jnp.float32)
    attn = jax.nn.softmax(s, axis=-1)
    w = jnp.dot(attn.astype(cdt), esel, preferred_element_type=jnp.float32)
    tower = jnp.dot((w * vals).astype(cdt), gsel, preferred_element_type=jnp.float32)
    reg = jnp.full((x.shape[0],), -(1.0 / E) * mu * (1.0 + E * 1e-6), jnp.float32)
    return tower, reg


def init_params(key, input_dim, expert_hidden_sizes, num_experts, num_tasks):
    h1, d = expert_hidden_sizes
    ks = jax.random.split(key, 7)
    w1 = jax.random.normal(ks[0], (num_experts, input_dim, h1), jnp.float32) * 0.1
    b1 = jax.random.normal(ks[1], (num_experts, h1), jnp.float32) * 0.01
    w2 = jax.random.normal(ks[2], (num_experts, h1, d), jnp.float32) * 0.1
    b2 = jax.random.normal(ks[3], (num_experts, d), jnp.float32) * 0.01
    km = jax.random.normal(ks[4], (num_experts, d, d), jnp.float32)
    vm = jax.random.normal(ks[5], (num_experts, d, d), jnp.float32)
    task_queries = jax.random.normal(ks[6], (num_tasks, d), jnp.float32)
    return (w1, b1, w2, b2, km, vm, task_queries)


if __name__ == "__main__":
    batch = 8
    input_dim = 32
    expert_hidden_sizes = (64, 32)   # two Linear layers per expert, ReLU between
    num_experts = 4                  # E*D = 128 -> one full vreg lane span
    num_tasks = 3
    mu = 0.01

    key = jax.random.PRNGKey(0)
    kp, kx, kt = jax.random.split(key, 3)
    params = init_params(kp, input_dim, expert_hidden_sizes, num_experts, num_tasks)
    x = jax.random.normal(kx, (batch, input_dim), jnp.float32)
    task = jax.random.randint(kt, (batch,), 0, num_tasks, dtype=jnp.int32)

    # f32 path: must match the faithful PyTorch-semantics reference.
    tower, reg = moe_forward(params, x, task, mu)
    jax.block_until_ready((tower, reg))
    tower_ref, reg_ref = moe_reference(params, x, task, mu)
    np.testing.assert_allclose(np.asarray(tower), np.asarray(tower_ref),
                               rtol=1e-2, atol=1e-3)
    np.testing.assert_allclose(np.asarray(reg), np.asarray(reg_ref),
                               rtol=1e-2, atol=1e-5)

    # Padded / multi-step-grid path (B not a tile multiple -> padded; nb >= 2).
    batch2 = 20
    kx2, kt2 = jax.random.split(jax.random.PRNGKey(1))
    x2 = jax.random.normal(kx2, (batch2, input_dim), jnp.float32)
    task2 = jax.random.randint(kt2, (batch2,), 0, num_tasks, dtype=jnp.int32)
    tower2, reg2 = moe_forward(params, x2, task2, mu)
    jax.block_until_ready((tower2, reg2))
    tower2_ref, reg2_ref = moe_reference(params, x2, task2, mu)
    np.testing.assert_allclose(np.asarray(tower2), np.asarray(tower2_ref),
                               rtol=1e-2, atol=1e-3)
    np.testing.assert_allclose(np.asarray(reg2), np.asarray(reg2_ref),
                               rtol=1e-2, atol=1e-5)

    # bf16 MXU-operand fast path (valid on v5e/v6e/v7x): checked against a jnp
    # reference that uses the identical fused bf16 operands.
    tower16, reg16 = moe_forward(params, x, task, mu, compute_dtype=jnp.bfloat16)
    jax.block_until_ready((tower16, reg16))
    tower_f, reg_f = moe_fused_reference(params, x, task, mu,
                                         compute_dtype=jnp.bfloat16)
    np.testing.assert_allclose(np.asarray(tower16), np.asarray(tower_f),
                               rtol=1e-2, atol=1e-2)
    np.testing.assert_allclose(np.asarray(reg16), np.asarray(reg_f),
                               rtol=1e-2, atol=1e-4)

    print("KERNEL_OK")
</pallas_src>

<mosaic_0001>
module attributes {stable_mosaic.version = 11 : i64} {
  func.func @_moe_kernel(%arg0: i32, %arg1: memref<8x32xf32, #tpu.memory_space<vmem>>, %arg2: memref<8x1xi32, #tpu.memory_space<vmem>>, %arg3: memref<32x256xf32, #tpu.memory_space<vmem>>, %arg4: memref<1x256xf32, #tpu.memory_space<vmem>>, %arg5: memref<256x256xf32, #tpu.memory_space<vmem>>, %arg6: memref<1x256xf32, #tpu.memory_space<vmem>>, %arg7: memref<3x128xf32, #tpu.memory_space<vmem>>, %arg8: memref<128x4xf32, #tpu.memory_space<vmem>>, %arg9: memref<4x128xf32, #tpu.memory_space<vmem>>, %arg10: memref<128x32xf32, #tpu.memory_space<vmem>>, %arg11: memref<8x32xf32, #tpu.memory_space<vmem>>) attributes {dimension_semantics = [#tpu.dimension_semantics<parallel>], iteration_bounds = array<i64: 1>, scalar_prefetch = 0 : i64, scratch_operands = 0 : i64, tpu.core_type = #tpu.core_type<tc>, window_params = [{transform_indices = @transform_0, window_bounds = array<i64: 8, 32>}, {transform_indices = @transform_1, window_bounds = array<i64: 8, 1>}, {pipeline_mode = #tpu.pipeline_mode<synchronous>, transform_indices = @transform_2, window_bounds = array<i64: 32, 256>}, {pipeline_mode = #tpu.pipeline_mode<synchronous>, transform_indices = @transform_3, window_bounds = array<i64: 1, 256>}, {pipeline_mode = #tpu.pipeline_mode<synchronous>, transform_indices = @transform_4, window_bounds = array<i64: 256, 256>}, {pipeline_mode = #tpu.pipeline_mode<synchronous>, transform_indices = @transform_5, window_bounds = array<i64: 1, 256>}, {pipeline_mode = #tpu.pipeline_mode<synchronous>, transform_indices = @transform_6, window_bounds = array<i64: 3, 128>}, {pipeline_mode = #tpu.pipeline_mode<synchronous>, transform_indices = @transform_7, window_bounds = array<i64: 128, 4>}, {pipeline_mode = #tpu.pipeline_mode<synchronous>, transform_indices = @transform_8, window_bounds = array<i64: 4, 128>}, {pipeline_mode = #tpu.pipeline_mode<synchronous>, transform_indices = @transform_9, window_bounds = array<i64: 128, 32>}, {transform_indices = @transform_10, window_bounds = array<i64: 8, 32>}]} {
    %c0 = arith.constant 0 : index
    %c0_0 = arith.constant 0 : index
    %0 = vector.load %arg1[%c0, %c0_0] : memref<8x32xf32, #tpu.memory_space<vmem>>, vector<8x32xf32>
    %c0_1 = arith.constant 0 : index
    %c0_2 = arith.constant 0 : index
    %1 = vector.load %arg3[%c0_1, %c0_2] : memref<32x256xf32, #tpu.memory_space<vmem>>, vector<32x256xf32>
    %cst = arith.constant dense<0.000000e+00> : vector<8x256xf32>
    %2 = tpu.matmul %0, %1, %cst {dimension_numbers = #tpu.dot_dimension_numbers<[1], [0], [0], [1], [0, 0, 1, 1], [], []>} : vector<8x32xf32>, vector<32x256xf32>, vector<8x256xf32> -> vector<8x256xf32>
    %c0_3 = arith.constant 0 : index
    %c0_4 = arith.constant 0 : index
    %3 = vector.load %arg4[%c0_3, %c0_4] : memref<1x256xf32, #tpu.memory_space<vmem>>, vector<1x256xf32>
    %4 = vector.broadcast %3 : vector<1x256xf32> to vector<8x256xf32>
    %5 = arith.addf %2, %4 : vector<8x256xf32>
    %cst_5 = arith.constant 0.000000e+00 : f32
    %6 = vector.broadcast %cst_5 : f32 to vector<8x256xf32>
    %7 = arith.maximumf %5, %6 : vector<8x256xf32>
    %c0_6 = arith.constant 0 : index
    %c0_7 = arith.constant 0 : index
    %8 = vector.load %arg5[%c0_6, %c0_7] : memref<256x256xf32, #tpu.memory_space<vmem>>, vector<256x256xf32>
    %cst_8 = arith.constant dense<0.000000e+00> : vector<8x256xf32>
    %9 = tpu.matmul %7, %8, %cst_8 {dimension_numbers = #tpu.dot_dimension_numbers<[1], [0], [0], [1], [0, 0, 1, 1], [], []>} : vector<8x256xf32>, vector<256x256xf32>, vector<8x256xf32> -> vector<8x256xf32>
    %c0_9 = arith.constant 0 : index
    %c0_10 = arith.constant 0 : index
    %10 = vector.load %arg6[%c0_9, %c0_10] : memref<1x256xf32, #tpu.memory_space<vmem>>, vector<1x256xf32>
    %11 = vector.broadcast %10 : vector<1x256xf32> to vector<8x256xf32>
    %12 = arith.addf %9, %11 : vector<8x256xf32>
    %13 = vector.extract_strided_slice %12 {offsets = [0, 0], sizes = [8, 128], strides = [1, 1]} : vector<8x256xf32> to vector<8x128xf32>
    %14 = vector.extract_strided_slice %12 {offsets = [0, 128], sizes = [8, 128], strides = [1, 1]} : vector<8x256xf32> to vector<8x128xf32>
    %15 = tpu.iota {dimensions = array<i32: 1>} : vector<8x3xi32>
    %c0_11 = arith.constant 0 : index
    %c0_12 = arith.constant 0 : index
    %16 = vector.load %arg2[%c0_11, %c0_12] : memref<8x1xi32, #tpu.memory_space<vmem>>, vector<8x1xi32>
    %17 = vector.broadcast %16 : vector<8x1xi32> to vector<8x3xi32>
    %18 = arith.cmpi eq, %15, %17 : vector<8x3xi32>
    %19 = arith.extui %18 : vector<8x3xi1> to vector<8x3xi32>
    %20 = arith.sitofp %19 : vector<8x3xi32> to vector<8x3xf32>
    %c0_13 = arith.constant 0 : index
    %c0_14 = arith.constant 0 : index
    %21 = vector.load %arg7[%c0_13, %c0_14] : memref<3x128xf32, #tpu.memory_space<vmem>>, vector<3x128xf32>
    %cst_15 = arith.constant dense<0.000000e+00> : vector<8x128xf32>
    %22 = tpu.matmul %20, %21, %cst_15 {dimension_numbers = #tpu.dot_dimension_numbers<[1], [0], [0], [1], [0, 0, 1, 1], [], []>} : vector<8x3xf32>, vector<3x128xf32>, vector<8x128xf32> -> vector<8x128xf32>
    %23 = arith.mulf %13, %22 : vector<8x128xf32>
    %c0_16 = arith.constant 0 : index
    %c0_17 = arith.constant 0 : index
    %24 = vector.load %arg8[%c0_16, %c0_17] : memref<128x4xf32, #tpu.memory_space<vmem>>, vector<128x4xf32>
    %cst_18 = arith.constant dense<0.000000e+00> : vector<8x4xf32>
    %25 = tpu.matmul %23, %24, %cst_18 {dimension_numbers = #tpu.dot_dimension_numbers<[1], [0], [0], [1], [0, 0, 1, 1], [], []>} : vector<8x128xf32>, vector<128x4xf32>, vector<8x4xf32> -> vector<8x4xf32>
    %cst_19 = arith.constant dense<0xFF800000> : vector<8xf32>
    %26 = vector.multi_reduction <maximumf>, %25, %cst_19 [1] : vector<8x4xf32> to vector<8xf32>
    %27 = vector.shape_cast %26 : vector<8xf32> to vector<8x1xf32>
    %28 = vector.broadcast %27 : vector<8x1xf32> to vector<8x4xf32>
    %29 = arith.subf %25, %28 : vector<8x4xf32>
    %30 = math.exp %29 : vector<8x4xf32>
    %cst_20 = arith.constant dense<0.000000e+00> : vector<8xf32>
    %31 = vector.multi_reduction <add>, %30, %cst_20 [1] : vector<8x4xf32> to vector<8xf32>
    %32 = vector.shape_cast %31 : vector<8xf32> to vector<8x1xf32>
    %33 = tpu.reciprocal %32 {approx = true} : vector<8x1xf32> -> vector<8x1xf32>
    %34 = vector.broadcast %33 : vector<8x1xf32> to vector<8x4xf32>
    %35 = arith.mulf %30, %34 : vector<8x4xf32>
    %c0_21 = arith.constant 0 : index
    %c0_22 = arith.constant 0 : index
    %36 = vector.load %arg9[%c0_21, %c0_22] : memref<4x128xf32, #tpu.memory_space<vmem>>, vector<4x128xf32>
    %cst_23 = arith.constant dense<0.000000e+00> : vector<8x128xf32>
    %37 = tpu.matmul %35, %36, %cst_23 {dimension_numbers = #tpu.dot_dimension_numbers<[1], [0], [0], [1], [0, 0, 1, 1], [], []>} : vector<8x4xf32>, vector<4x128xf32>, vector<8x128xf32> -> vector<8x128xf32>
    %38 = arith.mulf %37, %14 : vector<8x128xf32>
    %c0_24 = arith.constant 0 : index
    %c0_25 = arith.constant 0 : index
    %39 = vector.load %arg10[%c0_24, %c0_25] : memref<128x32xf32, #tpu.memory_space<vmem>>, vector<128x32xf32>
    %cst_26 = arith.constant dense<0.000000e+00> : vector<8x32xf32>
    %40 = tpu.matmul %38, %39, %cst_26 {dimension_numbers = #tpu.dot_dimension_numbers<[1], [0], [0], [1], [0, 0, 1, 1], [], []>} : vector<8x128xf32>, vector<128x32xf32>, vector<8x32xf32> -> vector<8x32xf32>
    %c0_27 = arith.constant 0 : index
    %c0_28 = arith.constant 0 : index
    %41 = vector.load %arg11[%c0_27, %c0_28] : memref<8x32xf32, #tpu.memory_space<vmem>>, vector<8x32xf32>
    tpu.vector_store %arg11[%c0_27, %c0_28], %40 {strides = array<i32>} : memref<8x32xf32, #tpu.memory_space<vmem>>, vector<8x32xf32>,
    return
  }
  func.func @transform_0(%arg0: i32) -> (i32, i32) {
    %c0_i32 = arith.constant 0 : i32
    %c0_i32_0 = arith.constant 0 : i32
    return %arg0, %c0_i32 : i32, i32
  }
  func.func @transform_1(%arg0: i32) -> (i32, i32) {
    %c0_i32 = arith.constant 0 : i32
    %c0_i32_0 = arith.constant 0 : i32
    return %arg0, %c0_i32 : i32, i32
  }
  func.func @transform_2(%arg0: i32) -> (i32, i32) {
    %c0_i32 = arith.constant 0 : i32
    %c0_i32_0 = arith.constant 0 : i32
    %c0_i32_1 = arith.constant 0 : i32
    return %c0_i32, %c0_i32_0 : i32, i32
  }
  func.func @transform_3(%arg0: i32) -> (i32, i32) {
    %c0_i32 = arith.constant 0 : i32
    %c0_i32_0 = arith.constant 0 : i32
    %c0_i32_1 = arith.constant 0 : i32
    return %c0_i32, %c0_i32_0 : i32, i32
  }
  func.func @transform_4(%arg0: i32) -> (i32, i32) {
    %c0_i32 = arith.constant 0 : i32
    %c0_i32_0 = arith.constant 0 : i32
    %c0_i32_1 = arith.constant 0 : i32
    return %c0_i32, %c0_i32_0 : i32, i32
  }
  func.func @transform_5(%arg0: i32) -> (i32, i32) {
    %c0_i32 = arith.constant 0 : i32
    %c0_i32_0 = arith.constant 0 : i32
    %c0_i32_1 = arith.constant 0 : i32
    return %c0_i32, %c0_i32_0 : i32, i32
  }
  func.func @transform_6(%arg0: i32) -> (i32, i32) {
    %c0_i32 = arith.constant 0 : i32
    %c0_i32_0 = arith.constant 0 : i32
    %c0_i32_1 = arith.constant 0 : i32
    return %c0_i32, %c0_i32_0 : i32, i32
  }
  func.func @transform_7(%arg0: i32) -> (i32, i32) {
    %c0_i32 = arith.constant 0 : i32
    %c0_i32_0 = arith.constant 0 : i32
    %c0_i32_1 = arith.constant 0 : i32
    return %c0_i32, %c0_i32_0 : i32, i32
  }
  func.func @transform_8(%arg0: i32) -> (i32, i32) {
    %c0_i32 = arith.constant 0 : i32
    %c0_i32_0 = arith.constant 0 : i32
    %c0_i32_1 = arith.constant 0 : i32
    return %c0_i32, %c0_i32_0 : i32, i32
  }
  func.func @transform_9(%arg0: i32) -> (i32, i32) {
    %c0_i32 = arith.constant 0 : i32
    %c0_i32_0 = arith.constant 0 : i32
    %c0_i32_1 = arith.constant 0 : i32
    return %c0_i32, %c0_i32_0 : i32, i32
  }
  func.func @transform_10(%arg0: i32) -> (i32, i32) {
    %c0_i32 = arith.constant 0 : i32
    %c0_i32_0 = arith.constant 0 : i32
    return %arg0, %c0_i32 : i32, i32
  }
}

</mosaic_0001>

<llo_original>
// kernel: tpu_custom_call.1
$region0: #{tpu_custom_call.1}
  #allocation0 [shape = 'u32[]', space=smem, size = 0x4, offset = 0x4, fixed_abs, tag = 'smem constant byte address 0x4 - core index']
  #allocation1 [shape = 'u32[72,128]{1,0:T(1,128)}', space=vmem, size = 0x9000, scoped, tag = 'internal scratch']
  %s0 = inlined_call_operand.vmem [shape: f32[8,32], index: 0, kind: input, shape index: {}]
  %s1 = inlined_call_operand.vmem [shape: s32[8,1], index: 1, kind: input, shape index: {}]
  %s2 = inlined_call_operand.vmem [shape: f32[32,256], index: 2, kind: input, shape index: {}]
  %s3 = inlined_call_operand.vmem [shape: f32[1,256], index: 3, kind: input, shape index: {}]
  %s4 = inlined_call_operand.hbm [shape: f32[256,256], index: 4, kind: input, shape index: {}]
  %s5 = inlined_call_operand.vmem [shape: f32[1,256], index: 5, kind: input, shape index: {}]
  %s6 = inlined_call_operand.vmem [shape: f32[3,128], index: 6, kind: input, shape index: {}]
  %s7 = inlined_call_operand.vmem [shape: f32[128,4], index: 7, kind: input, shape index: {}]
  %s8 = inlined_call_operand.vmem [shape: f32[4,128], index: 8, kind: input, shape index: {}]
  %s9 = inlined_call_operand.vmem [shape: f32[128,32], index: 9, kind: input, shape index: {}]
  %s10 = inlined_call_operand.hbm [shape: f32[8,32], index: 10, kind: output, shape index: {}]
  %s11 = sld [smem:[#allocation0]]
  $region54: #{tpu_custom_call.1} parent=0
    _
  %s13 = ssub.s32 1, %s11
  %s14 = scalar_select 0, %s13, %s11
  $region1: #{tpu_custom_call.1} parent=0
    #allocation2 [shape = 'u8[262144]{0}', space=vmem, size = 0x40000, scoped, tag = 'input window, operand 4, single buffered']
    #allocation3 [shape = 's32[1]{0}', space=sflag, size = 0x4, scoped, tag = 'scoped memory for tpu_custom_call.1']
    #allocation4 [shape = 's32[1]{0}', space=sflag, size = 0x4, scoped, tag = 'scoped memory for tpu_custom_call.1']
    #allocation5 [shape = 'u8[4096]{0}', space=vmem, size = 0x1000, scoped, tag = 'output window, operand 0, single buffered']
    %15 = vsyncpa [#allocation3], 0
    %16 = vsyncpa [#allocation4], 0
    // Predicated region
    $region2: #{tpu_custom_call.1} parent=1 // pred_check
      _
    $region3: #{tpu_custom_call.1} parent=1 // pred_check_branch
      %18 = sbr.rel (0) target = $region5
    $region4: #{tpu_custom_call.1} parent=1 // pred_region
      _
    $region5: #{tpu_custom_call.1} parent=1 // pred_fallthru
      _
    // Predicated region
    $region6: #{tpu_custom_call.1} parent=1 // pred_check
      _
    $region7: #{tpu_custom_call.1} parent=1 // pred_check_branch
      %20 = sbr.rel (0) target = $region9
    $region8: #{tpu_custom_call.1} parent=1 // pred_region
      _
    $region9: #{tpu_custom_call.1} parent=1 // pred_fallthru
      _
    // Predicated region
    $region10: #{tpu_custom_call.1} parent=1 // pred_check
      _
    $region11: #{tpu_custom_call.1} parent=1 // pred_check_branch
      %22 = sbr.rel (0) target = $region13
    $region12: #{tpu_custom_call.1} parent=1 // pred_region
      _
    $region13: #{tpu_custom_call.1} parent=1 // pred_fallthru
      _
    // Predicated region
    $region14: #{tpu_custom_call.1} parent=1 // pred_check
      _
    $region15: #{tpu_custom_call.1} parent=1 // pred_check_branch
      %24 = sbr.rel (0) target = $region17
    $region16: #{tpu_custom_call.1} parent=1 // pred_region
      _
    $region17: #{tpu_custom_call.1} parent=1 // pred_fallthru
      _
    // Predicated region
    $region18: #{tpu_custom_call.1} parent=1 // pred_check
      _
    $region19: #{tpu_custom_call.1} parent=1 // pred_check_branch
      %26 = sbr.rel (0) target = $region21
    $region20: #{tpu_custom_call.1} parent=1 // pred_region
      %28 = vsyncadd [#allocation3], 0
      %s29 = sshll.u32 %s4, 4
      %s30 = int_to_ptr.hbm [resolvable:$true] %s29
      %s31 = sshll.u32 [#allocation2], 4
      %s32 = int_to_ptr.vmem [resolvable:$true] %s31
      %37 = dma.hbm_to_vmem [thread:$0]  %s30, 8192, %s32, [#allocation3], 256, 256, 16
    $region21: #{tpu_custom_call.1} parent=1 // pred_fallthru
      _
    // Predicated region
    $region22: #{tpu_custom_call.1} parent=1 // pred_check
      _
    $region23: #{tpu_custom_call.1} parent=1 // pred_check_branch
      %39 = sbr.rel (0) target = $region25
    $region24: #{tpu_custom_call.1} parent=1 // pred_region
      _
    $region25: #{tpu_custom_call.1} parent=1 // pred_fallthru
      _
    // Predicated region
    $region26: #{tpu_custom_call.1} parent=1 // pred_check
      _
    $region27: #{tpu_custom_call.1} parent=1 // pred_check_branch
      %41 = sbr.rel (0) target = $region29
    $region28: #{tpu_custom_call.1} parent=1 // pred_region
      _
    $region29: #{tpu_custom_call.1} parent=1 // pred_fallthru
      _
    // Predicated region
    $region30: #{tpu_custom_call.1} parent=1 // pred_check
      _
    $region31: #{tpu_custom_call.1} parent=1 // pred_check_branch
      %43 = sbr.rel (0) target = $region33
    $region32: #{tpu_custom_call.1} parent=1 // pred_region
      _
    $region33: #{tpu_custom_call.1} parent=1 // pred_fallthru
      _
    // Predicated region
    $region34: #{tpu_custom_call.1} parent=1 // pred_check
      _
    $region35: #{tpu_custom_call.1} parent=1 // pred_check_branch
      %45 = sbr.rel (0) target = $region37
    $region36: #{tpu_custom_call.1} parent=1 // pred_region
      _
    $region37: #{tpu_custom_call.1} parent=1 // pred_fallthru
      _
    // Predicated region
    $region38: #{tpu_custom_call.1} parent=1 // pred_check
      _
    $region39: #{tpu_custom_call.1} parent=1 // pred_check_branch
      %47 = sbr.rel (0) target = $region41
    $region40: #{tpu_custom_call.1} parent=1 // pred_region
      _
    $region41: #{tpu_custom_call.1} parent=1 // pred_fallthru
      _
    // Predicated region
    $region42: #{tpu_custom_call.1} parent=1 // pred_check
      _
    $region43: #{tpu_custom_call.1} parent=1 // pred_check_branch
      %49 = sbr.rel (0) target = $region45
    $region44: #{tpu_custom_call.1} parent=1 // pred_region
      %51 = dma.done [#allocation3], 8192
    $region45: #{tpu_custom_call.1} parent=1 // pred_fallthru
      _
    %v52 = vld [vmem:[%s0] sm:$0xff]
    %v53 = vld [vmem:[%s2] sm:$0xff]
    %v54 = vld [vmem:[%s2 + $0x8] sm:$0xff]
    %v55 = vld [vmem:[%s2 + $0x10] sm:$0xff]
    %v56 = vld [vmem:[%s2 + $0x18] sm:$0xff]
    %v57 = vld [vmem:[%s2 + $0x20] sm:$0xff]
    %v58 = vld [vmem:[%s2 + $0x28] sm:$0xff]
    %v59 = vld [vmem:[%s2 + $0x30] sm:$0xff]
    %v60 = vld [vmem:[%s2 + $0x38] sm:$0xff]
    %v61 = vld [vmem:[%s3] sm:$0x3]
    %v63 = vperm.slane %v61, 0
    %v64 = vperm.slane %v61, 1
    %vm67 = vcmask 261120
    %v69 = vsel %vm67, %v52, 0
    %71 = vmatpush.msra.mxu0 0.0
    %72 = vmatpush.msra.mxu0 0.0
    %73 = vmatpush.msra.mxu0 0.0
    %74 = vmatpush.msra.mxu0 0.0
    %75 = vmatpush.msra.mxu0 0.0
    %76 = vmatpush.msra.mxu0 0.0
    %77 = vmatpush.msra.mxu0 0.0
    %78 = vmatpush.msra.mxu0 0.0
    %79 = vmatpush.msra.mxu0 0.0
    %80 = vmatpush.msra.mxu0 0.0
    %81 = vmatpush.msra.mxu0 0.0
    %82 = vmatpush.msra.mxu0 0.0
    %83 = vmatpush.msra.mxu0 %v59
    %84 = vmatpush.msra.mxu0 %v57
    %85 = vmatpush.msra.mxu0 %v55
    %86 = vmatpush.msra.mxu0 %v53
    %87 = vmatmul.f32.gmra.mxu0 %v69
    %v88 = vpop.f32.mrf.mxu0
    %v89 = vadd.f32 %v63, %v88
    %90 = vdwg.mxu0
    %91 = vmatpush.msra.mxu0 0.0
    %92 = vmatpush.msra.mxu0 0.0
    %93 = vmatpush.msra.mxu0 0.0
    %94 = vmatpush.msra.mxu0 0.0
    %95 = vmatpush.msra.mxu0 0.0
    %96 = vmatpush.msra.mxu0 0.0
    %97 = vmatpush.msra.mxu0 0.0
    %98 = vmatpush.msra.mxu0 0.0
    %99 = vmatpush.msra.mxu0 0.0
    %100 = vmatpush.msra.mxu0 0.0
    %101 = vmatpush.msra.mxu0 0.0
    %102 = vmatpush.msra.mxu0 0.0
    %103 = vmatpush.msra.mxu0 %v60
    %104 = vmatpush.msra.mxu0 %v58
    %105 = vmatpush.msra.mxu0 %v56
    %106 = vmatpush.msra.mxu0 %v54
    %107 = vmatmul.f32.gmra.mxu0 %v69
    %v108 = vpop.f32.mrf.mxu0
    %v109 = vadd.f32 %v64, %v108
    %110 = vdwg.mxu0
    %v111 = vmax.f32 %v89, 0.0
    %v112 = vmax.f32 %v109, 0.0
    %v113 = vld [vmem:[#allocation2] sm:$0xff]
    %v114 = vld [vmem:[#allocation2 + $0x8] sm:$0xff]
    %v115 = vld [vmem:[#allocation2 + $0x10] sm:$0xff]
    %v116 = vld [vmem:[#allocation2 + $0x18] sm:$0xff]
    %v117 = vld [vmem:[#allocation2 + $0x20] sm:$0xff]
    %v118 = vld [vmem:[#allocation2 + $0x28] sm:$0xff]
    %v119 = vld [vmem:[#allocation2 + $0x30] sm:$0xff]
    %v120 = vld [vmem:[#allocation2 + $0x38] sm:$0xff]
    %v121 = vld [vmem:[#allocation2 + $0x40] sm:$0xff]
    %v122 = vld [vmem:[#allocation2 + $0x48] sm:$0xff]
    %v123 = vld [vmem:[#allocation2 + $0x50] sm:$0xff]
    %v124 = vld [vmem:[#allocation2 + $0x58] sm:$0xff]
    %v125 = vld [vmem:[#allocation2 + $0x60] sm:$0xff]
    %v126 = vld [vmem:[#allocation2 + $0x68] sm:$0xff]
    %v127 = vld [vmem:[#allocation2 + $0x70] sm:$0xff]
    %v128 = vld [vmem:[#allocation2 + $0x78] sm:$0xff]
    %v129 = vld [vmem:[#allocation2 + $0x80] sm:$0xff]
    %v130 = vld [vmem:[#allocation2 + $0x88] sm:$0xff]
    %v131 = vld [vmem:[#allocation2 + $0x90] sm:$0xff]
    %v132 = vld [vmem:[#allocation2 + $0x98] sm:$0xff]
    %v133 = vld [vmem:[#allocation2 + $0xa0] sm:$0xff]
    %v134 = vld [vmem:[#allocation2 + $0xa8] sm:$0xff]
    %v135 = vld [vmem:[#allocation2 + $0xb0] sm:$0xff]
    %v136 = vld [vmem:[#allocation2 + $0xb8] sm:$0xff]
    %v137 = vld [vmem:[#allocation2 + $0xc0] sm:$0xff]
    %v138 = vld [vmem:[#allocation2 + $0xc8] sm:$0xff]
    %v139 = vld [vmem:[#allocation2 + $0xd0] sm:$0xff]
    %v140 = vld [vmem:[#allocation2 + $0xd8] sm:$0xff]
    %v141 = vld [vmem:[#allocation2 + $0xe0] sm:$0xff]
    %v142 = vld [vmem:[#allocation2 + $0xe8] sm:$0xff]
    %v143 = vld [vmem:[#allocation2 + $0xf0] sm:$0xff]
    %v144 = vld [vmem:[#allocation2 + $0xf8] sm:$0xff]
    %v145 = vld [vmem:[#allocation2 + $0x100] sm:$0xff]
    %v146 = vld [vmem:[#allocation2 + $0x108] sm:$0xff]
    %v147 = vld [vmem:[#allocation2 + $0x110] sm:$0xff]
    %v148 = vld [vmem:[#allocation2 + $0x118] sm:$0xff]
    %v149 = vld [vmem:[#allocation2 + $0x120] sm:$0xff]
    %v150 = vld [vmem:[#allocation2 + $0x128] sm:$0xff]
    %v151 = vld [vmem:[#allocation2 + $0x130] sm:$0xff]
    %v152 = vld [vmem:[#allocation2 + $0x138] sm:$0xff]
    %v153 = vld [vmem:[#allocation2 + $0x140] sm:$0xff]
    %v154 = vld [vmem:[#allocation2 + $0x148] sm:$0xff]
    %v155 = vld [vmem:[#allocation2 + $0x150] sm:$0xff]
    %v156 = vld [vmem:[#allocation2 + $0x158] sm:$0xff]
    %v157 = vld [vmem:[#allocation2 + $0x160] sm:$0xff]
    %v158 = vld [vmem:[#allocation2 + $0x168] sm:$0xff]
    %v159 = vld [vmem:[#allocation2 + $0x170] sm:$0xff]
    %v160 = vld [vmem:[#allocation2 + $0x178] sm:$0xff]
    %v161 = vld [vmem:[#allocation2 + $0x180] sm:$0xff]
    %v162 = vld [vmem:[#allocation2 + $0x188] sm:$0xff]
    %v163 = vld [vmem:[#allocation2 + $0x190] sm:$0xff]
    %v164 = vld [vmem:[#allocation2 + $0x198] sm:$0xff]
    %v165 = vld [vmem:[#allocation2 + $0x1a0] sm:$0xff]
    %v166 = vld [vmem:[#allocation2 + $0x1a8] sm:$0xff]
    %v167 = vld [vmem:[#allocation2 + $0x1b0] sm:$0xff]
    %v168 = vld [vmem:[#allocation2 + $0x1b8] sm:$0xff]
    %v169 = vld [vmem:[#allocation2 + $0x1c0] sm:$0xff]
    %v170 = vld [vmem:[#allocation2 + $0x1c8] sm:$0xff]
    %v171 = vld [vmem:[#allocation2 + $0x1d0] sm:$0xff]
    %v172 = vld [vmem:[#allocation2 + $0x1d8] sm:$0xff]
    %v173 = vld [vmem:[#allocation2 + $0x1e0] sm:$0xff]
    %v174 = vld [vmem:[#allocation2 + $0x1e8] sm:$0xff]
    %v175 = vld [vmem:[#allocation2 + $0x1f0] sm:$0xff]
    %v176 = vld [vmem:[#allocation2 + $0x1f8] sm:$0xff]
    %v177 = vld [vmem:[%s5] sm:$0x3]
    %v179 = vperm.slane %v177, 0
    %v180 = vperm.slane %v177, 1
    %183 = vmatpush.msra.mxu0 %v143
    %184 = vmatpush.msra.mxu0 %v141
    %185 = vmatpush.msra.mxu0 %v139
    %186 = vmatpush.msra.mxu0 %v137
    %187 = vmatpush.msra.mxu0 %v135
    %188 = vmatpush.msra.mxu0 %v133
    %189 = vmatpush.msra.mxu0 %v131
    %190 = vmatpush.msra.mxu0 %v129
    %191 = vmatpush.msra.mxu0 %v127
    %192 = vmatpush.msra.mxu0 %v125
    %193 = vmatpush.msra.mxu0 %v123
    %194 = vmatpush.msra.mxu0 %v121
    %195 = vmatpush.msra.mxu0 %v119
    %196 = vmatpush.msra.mxu0 %v117
    %197 = vmatpush.msra.mxu0 %v115
    %198 = vmatpush.msra.mxu0 %v113
    %199 = vmatmul.f32.gmra.mxu0 %v111
    %v200 = vpop.f32.mrf.mxu0
    %v201 = vadd.f32 %v179, %v200
    %202 = vdwg.mxu0
    %203 = vmatpush.msra.mxu0 %v175
    %204 = vmatpush.msra.mxu0 %v173
    %205 = vmatpush.msra.mxu0 %v171
    %206 = vmatpush.msra.mxu0 %v169
    %207 = vmatpush.msra.mxu0 %v167
    %208 = vmatpush.msra.mxu0 %v165
    %209 = vmatpush.msra.mxu0 %v163
    %210 = vmatpush.msra.mxu0 %v161
    %211 = vmatpush.msra.mxu0 %v159
    %212 = vmatpush.msra.mxu0 %v157
    %213 = vmatpush.msra.mxu0 %v155
    %214 = vmatpush.msra.mxu0 %v153
    %215 = vmatpush.msra.mxu0 %v151
    %216 = vmatpush.msra.mxu0 %v149
    %217 = vmatpush.msra.mxu0 %v147
    %218 = vmatpush.msra.mxu0 %v145
    %219 = vmatmul.f32.gmra.mxu0 %v112
    %v220 = vpop.f32.mrf.mxu0
    %v221 = vadd.f32 %v201, %v220
    %222 = vdwg.mxu0
    %223 = vmatpush.msra.mxu0 %v144
    %224 = vmatpush.msra.mxu0 %v142
    %225 = vmatpush.msra.mxu0 %v140
    %226 = vmatpush.msra.mxu0 %v138
    %227 = vmatpush.msra.mxu0 %v136
    %228 = vmatpush.msra.mxu0 %v134
    %229 = vmatpush.msra.mxu0 %v132
    %230 = vmatpush.msra.mxu0 %v130
    %231 = vmatpush.msra.mxu0 %v128
    %232 = vmatpush.msra.mxu0 %v126
    %233 = vmatpush.msra.mxu0 %v124
    %234 = vmatpush.msra.mxu0 %v122
    %235 = vmatpush.msra.mxu0 %v120
    %236 = vmatpush.msra.mxu0 %v118
    %237 = vmatpush.msra.mxu0 %v116
    %238 = vmatpush.msra.mxu0 %v114
    %239 = vmatmul.f32.gmra.mxu0 %v111
    %v240 = vpop.f32.mrf.mxu0
    %v241 = vadd.f32 %v180, %v240
    %242 = vdwg.mxu0
    %243 = vmatpush.msra.mxu0 %v176
    %244 = vmatpush.msra.mxu0 %v174
    %245 = vmatpush.msra.mxu0 %v172
    %246 = vmatpush.msra.mxu0 %v170
    %247 = vmatpush.msra.mxu0 %v168
    %248 = vmatpush.msra.mxu0 %v166
    %249 = vmatpush.msra.mxu0 %v164
    %250 = vmatpush.msra.mxu0 %v162
    %251 = vmatpush.msra.mxu0 %v160
    %252 = vmatpush.msra.mxu0 %v158
    %253 = vmatpush.msra.mxu0 %v156
    %254 = vmatpush.msra.mxu0 %v154
    %255 = vmatpush.msra.mxu0 %v152
    %256 = vmatpush.msra.mxu0 %v150
    %257 = vmatpush.msra.mxu0 %v148
    %258 = vmatpush.msra.mxu0 %v146
    %259 = vmatmul.f32.gmra.mxu0 %v112
    %v260 = vpop.f32.mrf.mxu0
    %v261 = vadd.f32 %v241, %v260
    %262 = vdwg.mxu0
    %v263 = vlaneseq
    %v264 = vand.u32 %v263, 127
    %v265 = vld [vmem:[%s1] sm:$0xff]
    %266 = vset.pattern.permute.xlu0 0
    %267 = vperm.xlu0 %266, %v265
    %v268 = vpop.permute.xlu0 %267
    %vm269 = vcmp.eq.s32.totalorder %v264, %v268
    %v270 = vsel %vm269, 1, 0
    %v271 = vcvt.s32.f32 %v270
    %v272 = vld [vmem:[%s6] sm:$0x7]
    %vm273 = vcmask 23552
    %v275 = vsel %vm273, %v271, 0
    %vm277 = vcmask 1042432
    %v279 = vsel %vm277, %v272, 0
    %281 = vmatpush.msra.mxu0 0.0
    %282 = vmatpush.msra.mxu0 0.0
    %283 = vmatpush.msra.mxu0 0.0
    %284 = vmatpush.msra.mxu0 0.0
    %285 = vmatpush.msra.mxu0 0.0
    %286 = vmatpush.msra.mxu0 0.0
    %287 = vmatpush.msra.mxu0 0.0
    %288 = vmatpush.msra.mxu0 0.0
    %289 = vmatpush.msra.mxu0 0.0
    %290 = vmatpush.msra.mxu0 0.0
    %291 = vmatpush.msra.mxu0 0.0
    %292 = vmatpush.msra.mxu0 0.0
    %293 = vmatpush.msra.mxu0 0.0
    %294 = vmatpush.msra.mxu0 0.0
    %295 = vmatpush.msra.mxu0 0.0
    %296 = vmatpush.msra.mxu0 %v279
    %297 = vmatmul.f32.gmra.mxu0 %v275
    %v298 = vpop.f32.mrf.mxu0
    %v299 = vadd.f32 0.0, %v298
    %300 = vdwg.mxu0
    %v301 = vmul.f32 %v221, %v299
    %v302 = vld [vmem:[%s7] sm:$0xff]
    %v303 = vld [vmem:[%s7 + $0x8] sm:$0xff]
    %v304 = vld [vmem:[%s7 + $0x10] sm:$0xff]
    %v305 = vld [vmem:[%s7 + $0x18] sm:$0xff]
    %v306 = vld [vmem:[%s7 + $0x20] sm:$0xff]
    %v307 = vld [vmem:[%s7 + $0x28] sm:$0xff]
    %v308 = vld [vmem:[%s7 + $0x30] sm:$0xff]
    %v309 = vld [vmem:[%s7 + $0x38] sm:$0xff]
    %v310 = vld [vmem:[%s7 + $0x40] sm:$0xff]
    %v311 = vld [vmem:[%s7 + $0x48] sm:$0xff]
    %v312 = vld [vmem:[%s7 + $0x50] sm:$0xff]
    %v313 = vld [vmem:[%s7 + $0x58] sm:$0xff]
    %v314 = vld [vmem:[%s7 + $0x60] sm:$0xff]
    %v315 = vld [vmem:[%s7 + $0x68] sm:$0xff]
    %v316 = vld [vmem:[%s7 + $0x70] sm:$0xff]
    %v317 = vld [vmem:[%s7 + $0x78] sm:$0xff]
    %318 = vmatpush.msra.mxu0 %v317
    %319 = vmatpush.msra.mxu0 %v316
    %320 = vmatpush.msra.mxu0 %v315
    %321 = vmatpush.msra.mxu0 %v314
    %322 = vmatpush.msra.mxu0 %v313
    %323 = vmatpush.msra.mxu0 %v312
    %324 = vmatpush.msra.mxu0 %v311
    %325 = vmatpush.msra.mxu0 %v310
    %326 = vmatpush.msra.mxu0 %v309
    %327 = vmatpush.msra.mxu0 %v308
    %328 = vmatpush.msra.mxu0 %v307
    %329 = vmatpush.msra.mxu0 %v306
    %330 = vmatpush.msra.mxu0 %v305
    %331 = vmatpush.msra.mxu0 %v304
    %332 = vmatpush.msra.mxu0 %v303
    %333 = vmatpush.msra.mxu0 %v302
    %334 = vmatmul.f32.gmra.mxu0 %v301
    %v335 = vpop.f32.mrf.mxu0
    %v336 = vadd.f32 0.0, %v335
    %337 = vdwg.mxu0
    %vm338 = vcmask 31744
    %v339 = vsel %vm338, %v336, -inf
    %340 = vmax.xlane.f32.xlu0 %v339
    %v341 = vpop.xlane.xlu0 %340
    %v342 = vsub.f32 %v336, %v341
    %v343 = vmul.f32 %v342, 1.442695
    %v344 = vpow.pop %v343
    %v345 = vsel %vm338, %v344, 0.0
    %346 = vadd.xlane.f32.xlu0 %v345
    %v347 = vpop.xlane.xlu0 %346
    %v348 = vrcp.pop %v347
    %v349 = vmul.f32 %v344, %v348
    %v350 = vld [vmem:[%s8] sm:$0xf]
    %v352 = vsel %vm338, %v349, 0
    %vm354 = vcmask 1043456
    %v356 = vsel %vm354, %v350, 0
    %358 = vmatpush.msra.mxu0 0.0
    %359 = vmatpush.msra.mxu0 0.0
    %360 = vmatpush.msra.mxu0 0.0
    %361 = vmatpush.msra.mxu0 0.0
    %362 = vmatpush.msra.mxu0 0.0
    %363 = vmatpush.msra.mxu0 0.0
    %364 = vmatpush.msra.mxu0 0.0
    %365 = vmatpush.msra.mxu0 0.0
    %366 = vmatpush.msra.mxu0 0.0
    %367 = vmatpush.msra.mxu0 0.0
    %368 = vmatpush.msra.mxu0 0.0
    %369 = vmatpush.msra.mxu0 0.0
    %370 = vmatpush.msra.mxu0 0.0
    %371 = vmatpush.msra.mxu0 0.0
    %372 = vmatpush.msra.mxu0 0.0
    %373 = vmatpush.msra.mxu0 %v356
    %374 = vmatmul.f32.gmra.mxu0 %v352
    %v375 = vpop.f32.mrf.mxu0
    %v376 = vadd.f32 0.0, %v375
    %377 = vdwg.mxu0
    %v378 = vmul.f32 %v376, %v261
    %v379 = vld [vmem:[%s9] sm:$0xff]
    %v380 = vld [vmem:[%s9 + $0x8] sm:$0xff]
    %v381 = vld [vmem:[%s9 + $0x10] sm:$0xff]
    %v382 = vld [vmem:[%s9 + $0x18] sm:$0xff]
    %v383 = vld [vmem:[%s9 + $0x20] sm:$0xff]
    %v384 = vld [vmem:[%s9 + $0x28] sm:$0xff]
    %v385 = vld [vmem:[%s9 + $0x30] sm:$0xff]
    %v386 = vld [vmem:[%s9 + $0x38] sm:$0xff]
    %v387 = vld [vmem:[%s9 + $0x40] sm:$0xff]
    %v388 = vld [vmem:[%s9 + $0x48] sm:$0xff]
    %v389 = vld [vmem:[%s9 + $0x50] sm:$0xff]
    %v390 = vld [vmem:[%s9 + $0x58] sm:$0xff]
    %v391 = vld [vmem:[%s9 + $0x60] sm:$0xff]
    %v392 = vld [vmem:[%s9 + $0x68] sm:$0xff]
    %v393 = vld [vmem:[%s9 + $0x70] sm:$0xff]
    %v394 = vld [vmem:[%s9 + $0x78] sm:$0xff]
    %395 = vmatpush.msra.mxu0 %v394
    %396 = vmatpush.msra.mxu0 %v393
    %397 = vmatpush.msra.mxu0 %v392
    %398 = vmatpush.msra.mxu0 %v391
    %399 = vmatpush.msra.mxu0 %v390
    %400 = vmatpush.msra.mxu0 %v389
    %401 = vmatpush.msra.mxu0 %v388
    %402 = vmatpush.msra.mxu0 %v387
    %403 = vmatpush.msra.mxu0 %v386
    %404 = vmatpush.msra.mxu0 %v385
    %405 = vmatpush.msra.mxu0 %v384
    %406 = vmatpush.msra.mxu0 %v383
    %407 = vmatpush.msra.mxu0 %v382
    %408 = vmatpush.msra.mxu0 %v381
    %409 = vmatpush.msra.mxu0 %v380
    %410 = vmatpush.msra.mxu0 %v379
    %411 = vmatmul.f32.gmra.mxu0 %v378
    %v412 = vpop.f32.mrf.mxu0
    %v413 = vadd.f32 0.0, %v412
    %414 = vdwg.mxu0
    %415 = vst.msk [vmem:[#allocation5] sm:$0xff] %vm67, %v413
    // Predicated region
    $region46: #{tpu_custom_call.1} parent=1 // pred_check
      _
    $region47: #{tpu_custom_call.1} parent=1 // pred_check_branch
      %417 = sbr.rel (0) target = $region49
    $region48: #{tpu_custom_call.1} parent=1 // pred_region
      %419 = vsyncadd [#allocation4], 0
      %s421 = sshll.u32 [#allocation5], 4
      %s422 = int_to_ptr.vmem [resolvable:$true] %s421
      %s423 = sshll.u32 %s10, 4
      %s424 = int_to_ptr.hbm [resolvable:$true] %s423
      %426 = dma.vmem_to_hbm [thread:$0]  %s422, 128, %s424, [#allocation4]
    $region49: #{tpu_custom_call.1} parent=1 // pred_fallthru
      _
    // Predicated region
    $region50: #{tpu_custom_call.1} parent=1 // pred_check
      _
    $region51: #{tpu_custom_call.1} parent=1 // pred_check_branch
      %428 = sbr.rel (0) target = $region53
    $region52: #{tpu_custom_call.1} parent=1 // pred_region
      %430 = dma.done [#allocation4], 128
    $region53: #{tpu_custom_call.1} parent=1 // pred_fallthru
      _
    %431 = vsyncpa [#allocation3], 1
    %432 = vsyncpa [#allocation4], 1

</llo_original>
